<compile_context>
chip_gen: v5e
topology: v5e:2x2
jax: 0.10.0
libtpu: 0.0.40
codegen_flags: <defaults>
</compile_context>

<pallas_src>
import jax
import jax.numpy as jnp
from jax.experimental import pallas as pl
from jax.experimental.pallas import tpu as pltpu

K_NEIGHBORS = 5
_ACC_WIDTH = 128  # lane-dense running top-k buffer (only the first k lanes are meaningful)


def _round_up(x: int, m: int) -> int:
    return ((x + m - 1) // m) * m


def _pad2d(x, rows, cols, value=0.0):
    r, c = x.shape
    if r == rows and c == cols:
        return x
    return jnp.pad(x, ((0, rows - r), (0, cols - c)), constant_values=value)


def _make_fused_kernel(k: int, acc_width: int):
    def kernel(obs_ref, w1_ref, b1_ref, w2_ref, b2_ref, mem_ref, m2_ref,
               out_ref, emb_s, e2_s, acc_s):
        mj = pl.program_id(1)

        # ---- Encoder (runs once per batch tile): embedding stays resident in VMEM ----
        @pl.when(mj == 0)
        def _():
            h = jnp.dot(obs_ref[...], w1_ref[...],
                        preferred_element_type=jnp.float32) + b1_ref[...]
            h = jnp.maximum(h, 0.0)                                   # ReLU, f32 VPU
            emb = jnp.dot(h.astype(w2_ref.dtype), w2_ref[...],
                          preferred_element_type=jnp.float32) + b2_ref[...]
            emb_s[...] = emb
            e2_s[...] = jnp.sum(emb * emb, axis=-1, keepdims=True)    # ||e||^2
            acc_s[...] = jnp.full(acc_s.shape, jnp.inf, dtype=acc_s.dtype)

        # ---- Squared distances for this memory tile (MXU cross term, f32 accumulate) --
        emb = emb_s[...]
        cross = jax.lax.dot_general(
            emb.astype(mem_ref.dtype), mem_ref[...],
            dimension_numbers=(((1,), (1,)), ((), ())),
            preferred_element_type=jnp.float32)                       # [tb, tm]
        dist2 = e2_s[...] + m2_ref[...] - 2.0 * cross                 # [tb, tm]

        # ---- Online k-smallest merge: search over (this tile ∪ running top-k) --------
        d = jnp.concatenate([dist2, acc_s[...]], axis=1)              # [tb, tm + acc]
        width = d.shape[1]
        col = jax.lax.broadcasted_iota(jnp.int32, d.shape, 1)
        lane = jax.lax.broadcasted_iota(jnp.int32, (d.shape[0], acc_width), 1)
        new_acc = jnp.full((d.shape[0], acc_width), jnp.inf, dtype=jnp.float32)
        for j in range(k):
            rowmin = jnp.min(d, axis=-1, keepdims=True)
            # Remove exactly one occurrence (lowest index) -> sklearn-like tie handling;
            # duplicate memory rows are counted once each, as kneighbors would.
            sel = jnp.min(jnp.where(d == rowmin, col, width), axis=-1, keepdims=True)
            d = jnp.where(col == sel, jnp.inf, d)
            new_acc = jnp.where(lane == j, rowmin, new_acc)
        acc_s[...] = new_acc

        # ---- Finalize on the last memory tile: sqrt + per-row sum of k distances -----
        @pl.when(mj == pl.num_programs(1) - 1)
        def _():
            valid = lane < k
            dists = jnp.where(valid, jnp.sqrt(jnp.maximum(new_acc, 0.0)), 0.0)
            out_ref[...] = jnp.sum(dists, axis=-1, keepdims=True)

    return kernel


def episodic_novelty_forward(obs, memory, params, *, k=K_NEIGHBORS,
                             compute_dtype=jnp.float32,
                             mem_sq_norms=None, tb=None, tm=None):
    """obs: [B, F] f32, memory: [M, D] f32, params: dict of MLP weights.

    compute_dtype: dtype of the MXU operands (use jnp.bfloat16 on v6e/v7x for speed);
                   the distance / k-min epilogue always stays in f32 (v5e-safe).
    mem_sq_norms:  optional precomputed ||memory||^2 per row, shape [M] f32 (recompute
                   only when the episodic memory changes).
    """
    w1, b1, w2, b2 = params["w1"], params["b1"], params["w2"], params["b2"]
    B, F = obs.shape
    H = w1.shape[1]
    D = w2.shape[1]
    M = memory.shape[0]
    if M < k:
        raise ValueError("episodic memory must hold at least k entries")
    # TODO(synk): a partially-filled / growing episodic memory (pointer < capacity) needs a
    # per-row validity mask folded into mem_sq_norms (+inf for empty slots).

    # ---- tile sizes (lane/sublane aligned) ----------------------------------
    tb = min(128, _round_up(B, 8)) if tb is None else _round_up(tb, 8)
    tm = min(2048, _round_up(M, 128)) if tm is None else _round_up(tm, 128)
    B_pad, M_pad = _round_up(B, tb), _round_up(M, tm)
    Fp, Hp, Dp = _round_up(F, 128), _round_up(H, 128), _round_up(D, 128)

    # ---- precompute ||m||^2 once (f32); padded rows get +inf so they never win ----
    if mem_sq_norms is None:
        mem_sq_norms = jnp.sum(memory.astype(jnp.float32) ** 2, axis=1)
    m2 = _pad2d(mem_sq_norms.reshape(1, M).astype(jnp.float32), 1, M_pad, value=jnp.inf)

    # ---- zero-pad to lane-dense shapes; MXU operands in compute_dtype -------
    obs_p = _pad2d(obs, B_pad, Fp).astype(compute_dtype)
    w1_p = _pad2d(w1, Fp, Hp).astype(compute_dtype)
    w2_p = _pad2d(w2, Hp, Dp).astype(compute_dtype)
    b1_p = _pad2d(b1.reshape(1, H), 1, Hp).astype(jnp.float32)
    b2_p = _pad2d(b2.reshape(1, D), 1, Dp).astype(jnp.float32)
    mem_p = _pad2d(memory, M_pad, Dp).astype(compute_dtype)

    # ---- derive VMEM limit from the chosen tiles (v7x has only 64 MiB physical) ----
    itemsize = jnp.dtype(compute_dtype).itemsize
    tile_bytes = (
        2 * tm * Dp * itemsize                      # memory tile, double-buffered
        + 2 * tm * 4                                # ||m||^2 tile
        + 2 * tb * Fp * itemsize                    # obs tile
        + 2 * (Fp * Hp + Hp * Dp) * itemsize        # weights (resident)
        + 2 * (Hp + Dp) * 4                         # biases
        + 2 * tb * 4                                # output tile
        + (tb * Dp + tb + tb * _ACC_WIDTH) * 4      # scratch: emb, ||e||^2, top-k
    )
    vmem_limit = int(min(max(2 * tile_bytes + (8 << 20), 32 << 20), 48 << 20))

    kernel = _make_fused_kernel(k, _ACC_WIDTH)
    grid = (B_pad // tb, M_pad // tm)

    row_sums = pl.pallas_call(
        kernel,
        out_shape=jax.ShapeDtypeStruct((B_pad, 1), jnp.float32),
        grid_spec=pltpu.PrefetchScalarGridSpec(
            num_scalar_prefetch=0,
            grid=grid,
            in_specs=[
                pl.BlockSpec((tb, Fp), lambda bi, mj: (bi, 0)),   # obs
                pl.BlockSpec((Fp, Hp), lambda bi, mj: (0, 0)),    # w1
                pl.BlockSpec((1, Hp), lambda bi, mj: (0, 0)),     # b1
                pl.BlockSpec((Hp, Dp), lambda bi, mj: (0, 0)),    # w2
                pl.BlockSpec((1, Dp), lambda bi, mj: (0, 0)),     # b2
                pl.BlockSpec((tm, Dp), lambda bi, mj: (mj, 0)),   # memory tile
                pl.BlockSpec((1, tm), lambda bi, mj: (0, mj)),    # ||m||^2 tile
            ],
            out_specs=pl.BlockSpec((tb, 1), lambda bi, mj: (bi, 0)),
            scratch_shapes=[
                pltpu.VMEM((tb, Dp), jnp.float32),          # emb (resident across mem tiles)
                pltpu.VMEM((tb, 1), jnp.float32),           # ||e||^2
                pltpu.VMEM((tb, _ACC_WIDTH), jnp.float32),  # running k smallest dist^2
            ],
        ),
        compiler_params=pltpu.CompilerParams(
            dimension_semantics=("parallel", "arbitrary"),
            vmem_limit_bytes=vmem_limit,
        ),
    )(obs_p, w1_p, b1_p, w2_p, b2_p, mem_p, m2)

    # Padded batch rows are ignored here; mean over B queries * k neighbors.
    return jnp.sum(row_sums[:B, 0]) / jnp.float32(B * k)


# ---------------------------------------------------------------------------
# Pure-JAX reference (for sanity checks)
# ---------------------------------------------------------------------------
def _reference(obs, memory, params, k=K_NEIGHBORS):
    h = jnp.maximum(obs @ params["w1"] + params["b1"].reshape(1, -1), 0.0)
    emb = h @ params["w2"] + params["b2"].reshape(1, -1)
    d2 = (jnp.sum(emb ** 2, -1, keepdims=True)
          + jnp.sum(memory ** 2, -1)[None, :]
          - 2.0 * emb @ memory.T)
    dist = jnp.sqrt(jnp.maximum(d2, 0.0))
    knn_d, _ = jax.lax.top_k(-dist, k)
    return jnp.mean(-knn_d)


if __name__ == "__main__":
    key = jax.random.PRNGKey(0)
    B, F, H, D = 8, 32, 64, 512       # batch, in_state, hidden, embedding_dim (spec: 512)
    M = 64                            # episodic memory size

    k_obs, k_mem, k_w1, k_w2, k_obs2, k_mem2 = jax.random.split(key, 6)
    obs = jax.random.normal(k_obs, (B, F), dtype=jnp.float32)
    memory = jax.random.normal(k_mem, (M, D), dtype=jnp.float32)
    params = {
        "w1": jax.random.normal(k_w1, (F, H), dtype=jnp.float32) / jnp.sqrt(F),
        "b1": jnp.zeros((1, H), dtype=jnp.float32),
        "w2": jax.random.normal(k_w2, (H, D), dtype=jnp.float32) / jnp.sqrt(H),
        "b2": jnp.zeros((1, D), dtype=jnp.float32),
    }

    # 1) fused single-tile path, f32 MXU operands
    fwd = jax.jit(lambda o, m, p: episodic_novelty_forward(o, m, p))
    out = jax.block_until_ready(fwd(obs, memory, params))
    ref = _reference(obs, memory, params)
    assert jnp.allclose(out, ref, rtol=1e-4, atol=1e-4), (out, ref)

    # 2) multi-tile path: padded/tiled batch (parallel axis) + tiled memory (arbitrary axis)
    B2, M2 = 9, 300
    obs2 = jax.random.normal(k_obs2, (B2, F), dtype=jnp.float32)
    memory2 = jax.random.normal(k_mem2, (M2, D), dtype=jnp.float32)
    fwd_tiled = jax.jit(lambda o, m, p: episodic_novelty_forward(o, m, p, tb=8, tm=128))
    out2 = jax.block_until_ready(fwd_tiled(obs2, memory2, params))
    ref2 = _reference(obs2, memory2, params)
    assert jnp.allclose(out2, ref2, rtol=1e-4, atol=1e-4), (out2, ref2)

    # 3) bf16 MXU operands (v6e/v7x fast path), f32 epilogue — loose tolerance
    fwd_bf16 = jax.jit(lambda o, m, p: episodic_novelty_forward(
        o, m, p, compute_dtype=jnp.bfloat16))
    out3 = jax.block_until_ready(fwd_bf16(obs, memory, params))
    assert abs(float(out3) - float(ref)) / max(abs(float(ref)), 1e-6) < 0.08, (out3, ref)

    print("KERNEL_OK")
</pallas_src>

<mosaic_0001>
module attributes {stable_mosaic.version = 11 : i64} {
  func.func @kernel(%arg0: i32, %arg1: i32, %arg2: memref<8x128xf32, #tpu.memory_space<vmem>>, %arg3: memref<128x128xf32, #tpu.memory_space<vmem>>, %arg4: memref<1x128xf32, #tpu.memory_space<vmem>>, %arg5: memref<128x512xf32, #tpu.memory_space<vmem>>, %arg6: memref<1x512xf32, #tpu.memory_space<vmem>>, %arg7: memref<128x512xf32, #tpu.memory_space<vmem>>, %arg8: memref<1x128xf32, #tpu.memory_space<vmem>>, %arg9: memref<8x1xf32, #tpu.memory_space<vmem>>, %arg10: memref<8x512xf32, #tpu.memory_space<vmem>>, %arg11: memref<8x1xf32, #tpu.memory_space<vmem>>, %arg12: memref<8x128xf32, #tpu.memory_space<vmem>>) attributes {dimension_semantics = [#tpu.dimension_semantics<parallel>, #tpu.dimension_semantics<arbitrary>], iteration_bounds = array<i64: 1, 1>, scalar_prefetch = 0 : i64, scratch_operands = 3 : i64, tpu.core_type = #tpu.core_type<tc>, window_params = [{transform_indices = @transform_0, window_bounds = array<i64: 8, 128>}, {pipeline_mode = #tpu.pipeline_mode<synchronous>, transform_indices = @transform_1, window_bounds = array<i64: 128, 128>}, {pipeline_mode = #tpu.pipeline_mode<synchronous>, transform_indices = @transform_2, window_bounds = array<i64: 1, 128>}, {pipeline_mode = #tpu.pipeline_mode<synchronous>, transform_indices = @transform_3, window_bounds = array<i64: 128, 512>}, {pipeline_mode = #tpu.pipeline_mode<synchronous>, transform_indices = @transform_4, window_bounds = array<i64: 1, 512>}, {transform_indices = @transform_5, window_bounds = array<i64: 128, 512>}, {transform_indices = @transform_6, window_bounds = array<i64: 1, 128>}, {transform_indices = @transform_7, window_bounds = array<i64: 8, 1>}]} {
    %c0_i32 = arith.constant 0 : i32
    %0 = arith.cmpi eq, %arg1, %c0_i32 : i32
    %1 = arith.extui %0 : i1 to i32
    %c0_i32_0 = arith.constant 0 : i32
    %2 = arith.cmpi ne, %1, %c0_i32_0 : i32
    scf.if %2 {
      %c0_33 = arith.constant 0 : index
      %c0_34 = arith.constant 0 : index
      %98 = vector.load %arg2[%c0_33, %c0_34] : memref<8x128xf32, #tpu.memory_space<vmem>>, vector<8x128xf32>
      %c0_35 = arith.constant 0 : index
      %c0_36 = arith.constant 0 : index
      %99 = vector.load %arg3[%c0_35, %c0_36] : memref<128x128xf32, #tpu.memory_space<vmem>>, vector<128x128xf32>
      %cst_37 = arith.constant dense<0.000000e+00> : vector<8x128xf32>
      %100 = tpu.matmul %98, %99, %cst_37 {dimension_numbers = #tpu.dot_dimension_numbers<[1], [0], [0], [1], [0, 0, 1, 1], [], []>} : vector<8x128xf32>, vector<128x128xf32>, vector<8x128xf32> -> vector<8x128xf32>
      %c0_38 = arith.constant 0 : index
      %c0_39 = arith.constant 0 : index
      %101 = vector.load %arg4[%c0_38, %c0_39] : memref<1x128xf32, #tpu.memory_space<vmem>>, vector<1x128xf32>
      %102 = vector.broadcast %101 : vector<1x128xf32> to vector<8x128xf32>
      %103 = arith.addf %100, %102 : vector<8x128xf32>
      %cst_40 = arith.constant 0.000000e+00 : f32
      %104 = vector.broadcast %cst_40 : f32 to vector<8x128xf32>
      %105 = arith.maximumf %103, %104 : vector<8x128xf32>
      %c0_41 = arith.constant 0 : index
      %c0_42 = arith.constant 0 : index
      %106 = vector.load %arg5[%c0_41, %c0_42] : memref<128x512xf32, #tpu.memory_space<vmem>>, vector<128x512xf32>
      %cst_43 = arith.constant dense<0.000000e+00> : vector<8x512xf32>
      %107 = tpu.matmul %105, %106, %cst_43 {dimension_numbers = #tpu.dot_dimension_numbers<[1], [0], [0], [1], [0, 0, 1, 1], [], []>} : vector<8x128xf32>, vector<128x512xf32>, vector<8x512xf32> -> vector<8x512xf32>
      %c0_44 = arith.constant 0 : index
      %c0_45 = arith.constant 0 : index
      %108 = vector.load %arg6[%c0_44, %c0_45] : memref<1x512xf32, #tpu.memory_space<vmem>>, vector<1x512xf32>
      %109 = vector.broadcast %108 : vector<1x512xf32> to vector<8x512xf32>
      %110 = arith.addf %107, %109 : vector<8x512xf32>
      %c0_46 = arith.constant 0 : index
      %c0_47 = arith.constant 0 : index
      %111 = vector.load %arg10[%c0_46, %c0_47] : memref<8x512xf32, #tpu.memory_space<vmem>>, vector<8x512xf32>
      tpu.vector_store %arg10[%c0_46, %c0_47], %110 {strides = array<i32>} : memref<8x512xf32, #tpu.memory_space<vmem>>, vector<8x512xf32>,
      %112 = arith.mulf %110, %110 : vector<8x512xf32>
      %cst_48 = arith.constant dense<0.000000e+00> : vector<8xf32>
      %113 = vector.multi_reduction <add>, %112, %cst_48 [1] : vector<8x512xf32> to vector<8xf32>
      %114 = vector.shape_cast %113 : vector<8xf32> to vector<8x1xf32>
      %c0_49 = arith.constant 0 : index
      %c0_50 = arith.constant 0 : index
      %115 = vector.load %arg11[%c0_49, %c0_50] : memref<8x1xf32, #tpu.memory_space<vmem>>, vector<8x1xf32>
      tpu.vector_store %arg11[%c0_49, %c0_50], %114 {strides = array<i32>} : memref<8x1xf32, #tpu.memory_space<vmem>>, vector<8x1xf32>,
      %cst_51 = arith.constant 0x7F800000 : f32
      %116 = vector.broadcast %cst_51 : f32 to vector<8x128xf32>
      %c0_52 = arith.constant 0 : index
      %c0_53 = arith.constant 0 : index
      %117 = vector.load %arg12[%c0_52, %c0_53] : memref<8x128xf32, #tpu.memory_space<vmem>>, vector<8x128xf32>
      tpu.vector_store %arg12[%c0_52, %c0_53], %116 {strides = array<i32>} : memref<8x128xf32, #tpu.memory_space<vmem>>, vector<8x128xf32>,
    } else {
    }
    %c0 = arith.constant 0 : index
    %c0_1 = arith.constant 0 : index
    %3 = vector.load %arg10[%c0, %c0_1] : memref<8x512xf32, #tpu.memory_space<vmem>>, vector<8x512xf32>
    %c0_2 = arith.constant 0 : index
    %c0_3 = arith.constant 0 : index
    %4 = vector.load %arg7[%c0_2, %c0_3] : memref<128x512xf32, #tpu.memory_space<vmem>>, vector<128x512xf32>
    %cst = arith.constant dense<0.000000e+00> : vector<8x128xf32>
    %5 = tpu.matmul %3, %4, %cst {dimension_numbers = #tpu.dot_dimension_numbers<[1], [1], [0], [0], [0, 0, 1, 0], [], []>} : vector<8x512xf32>, vector<128x512xf32>, vector<8x128xf32> -> vector<8x128xf32>
    %c0_4 = arith.constant 0 : index
    %c0_5 = arith.constant 0 : index
    %6 = vector.load %arg11[%c0_4, %c0_5] : memref<8x1xf32, #tpu.memory_space<vmem>>, vector<8x1xf32>
    %c0_6 = arith.constant 0 : index
    %c0_7 = arith.constant 0 : index
    %7 = vector.load %arg8[%c0_6, %c0_7] : memref<1x128xf32, #tpu.memory_space<vmem>>, vector<1x128xf32>
    %8 = vector.broadcast %6 : vector<8x1xf32> to vector<8x128xf32>
    %9 = vector.broadcast %7 : vector<1x128xf32> to vector<8x128xf32>
    %10 = arith.addf %8, %9 : vector<8x128xf32>
    %cst_8 = arith.constant 2.000000e+00 : f32
    %11 = vector.broadcast %cst_8 : f32 to vector<8x128xf32>
    %12 = arith.mulf %11, %5 : vector<8x128xf32>
    %13 = arith.subf %10, %12 : vector<8x128xf32>
    %c0_9 = arith.constant 0 : index
    %c0_10 = arith.constant 0 : index
    %14 = vector.load %arg12[%c0_9, %c0_10] : memref<8x128xf32, #tpu.memory_space<vmem>>, vector<8x128xf32>
    %15 = tpu.concatenate %13, %14 in 1 : vector<8x128xf32>, vector<8x128xf32> -> vector<8x256xf32>
    %16 = tpu.iota {dimensions = array<i32: 1>} : vector<8x256xi32>
    %17 = tpu.iota {dimensions = array<i32: 1>} : vector<8x128xi32>
    %cst_11 = arith.constant 0x7F800000 : f32
    %18 = vector.broadcast %cst_11 : f32 to vector<8x128xf32>
    %cst_12 = arith.constant dense<0x7F800000> : vector<8xf32>
    %19 = vector.multi_reduction <minimumf>, %15, %cst_12 [1] : vector<8x256xf32> to vector<8xf32>
    %20 = vector.shape_cast %19 : vector<8xf32> to vector<8x1xf32>
    %21 = vector.broadcast %20 : vector<8x1xf32> to vector<8x256xf32>
    %22 = arith.cmpf oeq, %15, %21 : vector<8x256xf32>
    %c256_i32 = arith.constant 256 : i32
    %23 = vector.broadcast %c256_i32 : i32 to vector<8x256xi32>
    %24 = arith.select %22, %16, %23 : vector<8x256xi1>, vector<8x256xi32>
    %cst_13 = arith.constant dense<2147483647> : vector<8xi32>
    %25 = vector.multi_reduction <minsi>, %24, %cst_13 [1] : vector<8x256xi32> to vector<8xi32>
    %26 = vector.shape_cast %25 : vector<8xi32> to vector<8x1xi32>
    %27 = vector.broadcast %26 : vector<8x1xi32> to vector<8x256xi32>
    %28 = arith.cmpi eq, %16, %27 : vector<8x256xi32>
    %cst_14 = arith.constant 0x7F800000 : f32
    %29 = vector.broadcast %cst_14 : f32 to vector<8x256xf32>
    %30 = arith.select %28, %29, %15 : vector<8x256xi1>, vector<8x256xf32>
    %c0_i32_15 = arith.constant 0 : i32
    %31 = vector.broadcast %c0_i32_15 : i32 to vector<8x128xi32>
    %32 = arith.cmpi eq, %17, %31 : vector<8x128xi32>
    %33 = vector.shape_cast %20 : vector<8x1xf32> to vector<8x1xf32>
    %34 = vector.broadcast %33 : vector<8x1xf32> to vector<8x128xf32>
    %35 = arith.select %32, %34, %18 : vector<8x128xi1>, vector<8x128xf32>
    %cst_16 = arith.constant dense<0x7F800000> : vector<8xf32>
    %36 = vector.multi_reduction <minimumf>, %30, %cst_16 [1] : vector<8x256xf32> to vector<8xf32>
    %37 = vector.shape_cast %36 : vector<8xf32> to vector<8x1xf32>
    %38 = vector.broadcast %37 : vector<8x1xf32> to vector<8x256xf32>
    %39 = arith.cmpf oeq, %30, %38 : vector<8x256xf32>
    %c256_i32_17 = arith.constant 256 : i32
    %40 = vector.broadcast %c256_i32_17 : i32 to vector<8x256xi32>
    %41 = arith.select %39, %16, %40 : vector<8x256xi1>, vector<8x256xi32>
    %cst_18 = arith.constant dense<2147483647> : vector<8xi32>
    %42 = vector.multi_reduction <minsi>, %41, %cst_18 [1] : vector<8x256xi32> to vector<8xi32>
    %43 = vector.shape_cast %42 : vector<8xi32> to vector<8x1xi32>
    %44 = vector.broadcast %43 : vector<8x1xi32> to vector<8x256xi32>
    %45 = arith.cmpi eq, %16, %44 : vector<8x256xi32>
    %cst_19 = arith.constant 0x7F800000 : f32
    %46 = vector.broadcast %cst_19 : f32 to vector<8x256xf32>
    %47 = arith.select %45, %46, %30 : vector<8x256xi1>, vector<8x256xf32>
    %c1_i32 = arith.constant 1 : i32
    %48 = vector.broadcast %c1_i32 : i32 to vector<8x128xi32>
    %49 = arith.cmpi eq, %17, %48 : vector<8x128xi32>
    %50 = vector.shape_cast %37 : vector<8x1xf32> to vector<8x1xf32>
    %51 = vector.broadcast %50 : vector<8x1xf32> to vector<8x128xf32>
    %52 = arith.select %49, %51, %35 : vector<8x128xi1>, vector<8x128xf32>
    %cst_20 = arith.constant dense<0x7F800000> : vector<8xf32>
    %53 = vector.multi_reduction <minimumf>, %47, %cst_20 [1] : vector<8x256xf32> to vector<8xf32>
    %54 = vector.shape_cast %53 : vector<8xf32> to vector<8x1xf32>
    %55 = vector.broadcast %54 : vector<8x1xf32> to vector<8x256xf32>
    %56 = arith.cmpf oeq, %47, %55 : vector<8x256xf32>
    %c256_i32_21 = arith.constant 256 : i32
    %57 = vector.broadcast %c256_i32_21 : i32 to vector<8x256xi32>
    %58 = arith.select %56, %16, %57 : vector<8x256xi1>, vector<8x256xi32>
    %cst_22 = arith.constant dense<2147483647> : vector<8xi32>
    %59 = vector.multi_reduction <minsi>, %58, %cst_22 [1] : vector<8x256xi32> to vector<8xi32>
    %60 = vector.shape_cast %59 : vector<8xi32> to vector<8x1xi32>
    %61 = vector.broadcast %60 : vector<8x1xi32> to vector<8x256xi32>
    %62 = arith.cmpi eq, %16, %61 : vector<8x256xi32>
    %cst_23 = arith.constant 0x7F800000 : f32
    %63 = vector.broadcast %cst_23 : f32 to vector<8x256xf32>
    %64 = arith.select %62, %63, %47 : vector<8x256xi1>, vector<8x256xf32>
    %c2_i32 = arith.constant 2 : i32
    %65 = vector.broadcast %c2_i32 : i32 to vector<8x128xi32>
    %66 = arith.cmpi eq, %17, %65 : vector<8x128xi32>
    %67 = vector.shape_cast %54 : vector<8x1xf32> to vector<8x1xf32>
    %68 = vector.broadcast %67 : vector<8x1xf32> to vector<8x128xf32>
    %69 = arith.select %66, %68, %52 : vector<8x128xi1>, vector<8x128xf32>
    %cst_24 = arith.constant dense<0x7F800000> : vector<8xf32>
    %70 = vector.multi_reduction <minimumf>, %64, %cst_24 [1] : vector<8x256xf32> to vector<8xf32>
    %71 = vector.shape_cast %70 : vector<8xf32> to vector<8x1xf32>
    %72 = vector.broadcast %71 : vector<8x1xf32> to vector<8x256xf32>
    %73 = arith.cmpf oeq, %64, %72 : vector<8x256xf32>
    %c256_i32_25 = arith.constant 256 : i32
    %74 = vector.broadcast %c256_i32_25 : i32 to vector<8x256xi32>
    %75 = arith.select %73, %16, %74 : vector<8x256xi1>, vector<8x256xi32>
    %cst_26 = arith.constant dense<2147483647> : vector<8xi32>
    %76 = vector.multi_reduction <minsi>, %75, %cst_26 [1] : vector<8x256xi32> to vector<8xi32>
    %77 = vector.shape_cast %76 : vector<8xi32> to vector<8x1xi32>
    %78 = vector.broadcast %77 : vector<8x1xi32> to vector<8x256xi32>
    %79 = arith.cmpi eq, %16, %78 : vector<8x256xi32>
    %cst_27 = arith.constant 0x7F800000 : f32
    %80 = vector.broadcast %cst_27 : f32 to vector<8x256xf32>
    %81 = arith.select %79, %80, %64 : vector<8x256xi1>, vector<8x256xf32>
    %c3_i32 = arith.constant 3 : i32
    %82 = vector.broadcast %c3_i32 : i32 to vector<8x128xi32>
    %83 = arith.cmpi eq, %17, %82 : vector<8x128xi32>
    %84 = vector.shape_cast %71 : vector<8x1xf32> to vector<8x1xf32>
    %85 = vector.broadcast %84 : vector<8x1xf32> to vector<8x128xf32>
    %86 = arith.select %83, %85, %69 : vector<8x128xi1>, vector<8x128xf32>
    %cst_28 = arith.constant dense<0x7F800000> : vector<8xf32>
    %87 = vector.multi_reduction <minimumf>, %81, %cst_28 [1] : vector<8x256xf32> to vector<8xf32>
    %88 = vector.shape_cast %87 : vector<8xf32> to vector<8x1xf32>
    %c4_i32 = arith.constant 4 : i32
    %89 = vector.broadcast %c4_i32 : i32 to vector<8x128xi32>
    %90 = arith.cmpi eq, %17, %89 : vector<8x128xi32>
    %91 = vector.shape_cast %88 : vector<8x1xf32> to vector<8x1xf32>
    %92 = vector.broadcast %91 : vector<8x1xf32> to vector<8x128xf32>
    %93 = arith.select %90, %92, %86 : vector<8x128xi1>, vector<8x128xf32>
    %c0_29 = arith.constant 0 : index
    %c0_30 = arith.constant 0 : index
    %94 = vector.load %arg12[%c0_29, %c0_30] : memref<8x128xf32, #tpu.memory_space<vmem>>, vector<8x128xf32>
    tpu.vector_store %arg12[%c0_29, %c0_30], %93 {strides = array<i32>} : memref<8x128xf32, #tpu.memory_space<vmem>>, vector<8x128xf32>,
    %c0_i32_31 = arith.constant 0 : i32
    %95 = arith.cmpi eq, %arg1, %c0_i32_31 : i32
    %96 = arith.extui %95 : i1 to i32
    %c0_i32_32 = arith.constant 0 : i32
    %97 = arith.cmpi ne, %96, %c0_i32_32 : i32
    scf.if %97 {
      %c5_i32 = arith.constant 5 : i32
      %98 = vector.broadcast %c5_i32 : i32 to vector<8x128xi32>
      %99 = arith.cmpi slt, %17, %98 : vector<8x128xi32>
      %cst_33 = arith.constant 0.000000e+00 : f32
      %100 = vector.broadcast %cst_33 : f32 to vector<8x128xf32>
      %101 = arith.maximumf %93, %100 : vector<8x128xf32>
      %102 = math.sqrt %101 : vector<8x128xf32>
      %cst_34 = arith.constant 0.000000e+00 : f32
      %103 = vector.broadcast %cst_34 : f32 to vector<8x128xf32>
      %104 = arith.select %99, %102, %103 : vector<8x128xi1>, vector<8x128xf32>
      %cst_35 = arith.constant dense<0.000000e+00> : vector<8xf32>
      %105 = vector.multi_reduction <add>, %104, %cst_35 [1] : vector<8x128xf32> to vector<8xf32>
      %106 = vector.shape_cast %105 : vector<8xf32> to vector<8x1xf32>
      %c0_36 = arith.constant 0 : index
      %c0_37 = arith.constant 0 : index
      %107 = vector.load %arg9[%c0_36, %c0_37] : memref<8x1xf32, #tpu.memory_space<vmem>>, vector<8x1xf32>
      tpu.vector_store %arg9[%c0_36, %c0_37], %106 {strides = array<i32>} : memref<8x1xf32, #tpu.memory_space<vmem>>, vector<8x1xf32>,
    } else {
    }
    return
  }
  func.func @transform_0(%arg0: i32, %arg1: i32) -> (i32, i32) {
    %c0_i32 = arith.constant 0 : i32
    %c0_i32_0 = arith.constant 0 : i32
    return %arg0, %c0_i32 : i32, i32
  }
  func.func @transform_1(%arg0: i32, %arg1: i32) -> (i32, i32) {
    %c0_i32 = arith.constant 0 : i32
    %c0_i32_0 = arith.constant 0 : i32
    %c0_i32_1 = arith.constant 0 : i32
    return %c0_i32, %c0_i32_0 : i32, i32
  }
  func.func @transform_2(%arg0: i32, %arg1: i32) -> (i32, i32) {
    %c0_i32 = arith.constant 0 : i32
    %c0_i32_0 = arith.constant 0 : i32
    %c0_i32_1 = arith.constant 0 : i32
    return %c0_i32, %c0_i32_0 : i32, i32
  }
  func.func @transform_3(%arg0: i32, %arg1: i32) -> (i32, i32) {
    %c0_i32 = arith.constant 0 : i32
    %c0_i32_0 = arith.constant 0 : i32
    %c0_i32_1 = arith.constant 0 : i32
    return %c0_i32, %c0_i32_0 : i32, i32
  }
  func.func @transform_4(%arg0: i32, %arg1: i32) -> (i32, i32) {
    %c0_i32 = arith.constant 0 : i32
    %c0_i32_0 = arith.constant 0 : i32
    %c0_i32_1 = arith.constant 0 : i32
    return %c0_i32, %c0_i32_0 : i32, i32
  }
  func.func @transform_5(%arg0: i32, %arg1: i32) -> (i32, i32) {
    %c0_i32 = arith.constant 0 : i32
    %c0_i32_0 = arith.constant 0 : i32
    return %arg1, %c0_i32 : i32, i32
  }
  func.func @transform_6(%arg0: i32, %arg1: i32) -> (i32, i32) {
    %c0_i32 = arith.constant 0 : i32
    %c0_i32_0 = arith.constant 0 : i32
    return %c0_i32, %arg1 : i32, i32
  }
  func.func @transform_7(%arg0: i32, %arg1: i32) -> (i32, i32) {
    %c0_i32 = arith.constant 0 : i32
    %c0_i32_0 = arith.constant 0 : i32
    return %arg0, %c0_i32 : i32, i32
  }
}

</mosaic_0001>

<llo_original>
// kernel: _lambda_.1
$region0: #{_lambda_.1}
  #allocation0 [shape = 'u32[]', space=smem, size = 0x4, offset = 0x4, fixed_abs, tag = 'smem constant byte address 0x4 - core index']
  #allocation1 [shape = 'u32[72,128]{1,0:T(1,128)}', space=vmem, size = 0x9000, scoped, tag = 'internal scratch']
  #allocation2 [shape = 'f32[8,512]{1,0:T(8,128)}', space=vmem, size = 0x4000, scoped, tag = 'scratch operand']
  #allocation3 [shape = 'f32[8,1]{1,0:T(8,128)}', space=vmem, size = 0x1000, scoped, tag = 'scratch operand']
  #allocation4 [shape = 'f32[8,128]{1,0:T(8,128)}', space=vmem, size = 0x1000, scoped, tag = 'scratch operand']
  %s0 = inlined_call_operand.vmem [shape: f32[8,128], index: 0, kind: input, shape index: {}]
  %s1 = inlined_call_operand.vmem [shape: f32[128,128], index: 1, kind: input, shape index: {}]
  %s2 = inlined_call_operand.vmem [shape: f32[1,128], index: 2, kind: input, shape index: {}]
  %s3 = inlined_call_operand.vmem [shape: f32[128,512], index: 3, kind: input, shape index: {}]
  %s4 = inlined_call_operand.vmem [shape: f32[1,512], index: 4, kind: input, shape index: {}]
  %s5 = inlined_call_operand.vmem [shape: f32[128,512], index: 5, kind: input, shape index: {}]
  %s6 = inlined_call_operand.vmem [shape: f32[1,128], index: 6, kind: input, shape index: {}]
  %s7 = inlined_call_operand.vmem [shape: f32[8,1], index: 7, kind: output, shape index: {}]
  %s8 = sld [smem:[#allocation0]]
  $region46: #{_lambda_.1} parent=0
    _
  %s10 = ssub.s32 1, %s8
  %s11 = scalar_select 0, %s10, %s8
  // Predicated region
  $region2: #{_lambda_.1} parent=0 // pred_check
    _
  $region3: #{_lambda_.1} parent=0 // pred_check_branch
    %13 = sbr.rel (0) target = $region5
  $region4: #{_lambda_.1} parent=0 // pred_region
    _
  $region5: #{_lambda_.1} parent=0 // pred_fallthru
    _
  // Predicated region
  $region6: #{_lambda_.1} parent=0 // pred_check
    _
  $region7: #{_lambda_.1} parent=0 // pred_check_branch
    %15 = sbr.rel (0) target = $region9
  $region8: #{_lambda_.1} parent=0 // pred_region
    _
  $region9: #{_lambda_.1} parent=0 // pred_fallthru
    _
  // Predicated region
  $region10: #{_lambda_.1} parent=0 // pred_check
    _
  $region11: #{_lambda_.1} parent=0 // pred_check_branch
    %17 = sbr.rel (0) target = $region13
  $region12: #{_lambda_.1} parent=0 // pred_region
    _
  $region13: #{_lambda_.1} parent=0 // pred_fallthru
    _
  // Predicated region
  $region14: #{_lambda_.1} parent=0 // pred_check
    _
  $region15: #{_lambda_.1} parent=0 // pred_check_branch
    %19 = sbr.rel (0) target = $region17
  $region16: #{_lambda_.1} parent=0 // pred_region
    _
  $region17: #{_lambda_.1} parent=0 // pred_fallthru
    _
  // Predicated region
  $region18: #{_lambda_.1} parent=0 // pred_check
    _
  $region19: #{_lambda_.1} parent=0 // pred_check_branch
    %21 = sbr.rel (0) target = $region21
  $region20: #{_lambda_.1} parent=0 // pred_region
    _
  $region21: #{_lambda_.1} parent=0 // pred_fallthru
    _
  // Predicated region
  $region22: #{_lambda_.1} parent=0 // pred_check
    _
  $region23: #{_lambda_.1} parent=0 // pred_check_branch
    %23 = sbr.rel (0) target = $region25
  $region24: #{_lambda_.1} parent=0 // pred_region
    _
  $region25: #{_lambda_.1} parent=0 // pred_fallthru
    _
  // Predicated region
  $region26: #{_lambda_.1} parent=0 // pred_check
    _
  $region27: #{_lambda_.1} parent=0 // pred_check_branch
    %25 = sbr.rel (0) target = $region29
  $region28: #{_lambda_.1} parent=0 // pred_region
    _
  $region29: #{_lambda_.1} parent=0 // pred_fallthru
    _
  %p26 = scmp.eq.s32.totalorder 0, 0
  // Predicated region
  $region30: #{_lambda_.1} parent=0 // pred_check
    %p27 = pneg %p26
  $region31: #{_lambda_.1} parent=0 // pred_check_branch
    %29 = sbr.rel (%p27) target = $region33
  $region32: #{_lambda_.1} parent=0 // pred_region
    %v30 = vld [vmem:[%s0] sm:$0xff]
    %v31 = vld [vmem:[%s1] sm:$0xff]
    %v32 = vld [vmem:[%s1 + $0x8] sm:$0xff]
    %v33 = vld [vmem:[%s1 + $0x10] sm:$0xff]
    %v34 = vld [vmem:[%s1 + $0x18] sm:$0xff]
    %v35 = vld [vmem:[%s1 + $0x20] sm:$0xff]
    %v36 = vld [vmem:[%s1 + $0x28] sm:$0xff]
    %v37 = vld [vmem:[%s1 + $0x30] sm:$0xff]
    %v38 = vld [vmem:[%s1 + $0x38] sm:$0xff]
    %v39 = vld [vmem:[%s1 + $0x40] sm:$0xff]
    %v40 = vld [vmem:[%s1 + $0x48] sm:$0xff]
    %v41 = vld [vmem:[%s1 + $0x50] sm:$0xff]
    %v42 = vld [vmem:[%s1 + $0x58] sm:$0xff]
    %v43 = vld [vmem:[%s1 + $0x60] sm:$0xff]
    %v44 = vld [vmem:[%s1 + $0x68] sm:$0xff]
    %v45 = vld [vmem:[%s1 + $0x70] sm:$0xff]
    %v46 = vld [vmem:[%s1 + $0x78] sm:$0xff]
    %v47 = vld [vmem:[%s2] sm:$0x1]
    %v49 = vperm.slane %v47, 0
    %51 = vmatpush.msra.mxu0 %v46
    %52 = vmatpush.msra.mxu0 %v45
    %53 = vmatpush.msra.mxu0 %v44
    %54 = vmatpush.msra.mxu0 %v43
    %55 = vmatpush.msra.mxu0 %v42
    %56 = vmatpush.msra.mxu0 %v41
    %57 = vmatpush.msra.mxu0 %v40
    %58 = vmatpush.msra.mxu0 %v39
    %59 = vmatpush.msra.mxu0 %v38
    %60 = vmatpush.msra.mxu0 %v37
    %61 = vmatpush.msra.mxu0 %v36
    %62 = vmatpush.msra.mxu0 %v35
    %63 = vmatpush.msra.mxu0 %v34
    %64 = vmatpush.msra.mxu0 %v33
    %65 = vmatpush.msra.mxu0 %v32
    %66 = vmatpush.msra.mxu0 %v31
    %67 = vmatmul.f32.gmra.mxu0 %v30
    %v68 = vpop.f32.mrf.mxu0
    %v69 = vadd.f32 %v49, %v68
    %70 = vdwg.mxu0
    %v71 = vmax.f32 %v69, 0.0
    %v72 = vld [vmem:[%s3] sm:$0xff]
    %v73 = vld [vmem:[%s3 + $0x8] sm:$0xff]
    %v74 = vld [vmem:[%s3 + $0x10] sm:$0xff]
    %v75 = vld [vmem:[%s3 + $0x18] sm:$0xff]
    %v76 = vld [vmem:[%s3 + $0x20] sm:$0xff]
    %v77 = vld [vmem:[%s3 + $0x28] sm:$0xff]
    %v78 = vld [vmem:[%s3 + $0x30] sm:$0xff]
    %v79 = vld [vmem:[%s3 + $0x38] sm:$0xff]
    %v80 = vld [vmem:[%s3 + $0x40] sm:$0xff]
    %v81 = vld [vmem:[%s3 + $0x48] sm:$0xff]
    %v82 = vld [vmem:[%s3 + $0x50] sm:$0xff]
    %v83 = vld [vmem:[%s3 + $0x58] sm:$0xff]
    %v84 = vld [vmem:[%s3 + $0x60] sm:$0xff]
    %v85 = vld [vmem:[%s3 + $0x68] sm:$0xff]
    %v86 = vld [vmem:[%s3 + $0x70] sm:$0xff]
    %v87 = vld [vmem:[%s3 + $0x78] sm:$0xff]
    %v88 = vld [vmem:[%s3 + $0x80] sm:$0xff]
    %v89 = vld [vmem:[%s3 + $0x88] sm:$0xff]
    %v90 = vld [vmem:[%s3 + $0x90] sm:$0xff]
    %v91 = vld [vmem:[%s3 + $0x98] sm:$0xff]
    %v92 = vld [vmem:[%s3 + $0xa0] sm:$0xff]
    %v93 = vld [vmem:[%s3 + $0xa8] sm:$0xff]
    %v94 = vld [vmem:[%s3 + $0xb0] sm:$0xff]
    %v95 = vld [vmem:[%s3 + $0xb8] sm:$0xff]
    %v96 = vld [vmem:[%s3 + $0xc0] sm:$0xff]
    %v97 = vld [vmem:[%s3 + $0xc8] sm:$0xff]
    %v98 = vld [vmem:[%s3 + $0xd0] sm:$0xff]
    %v99 = vld [vmem:[%s3 + $0xd8] sm:$0xff]
    %v100 = vld [vmem:[%s3 + $0xe0] sm:$0xff]
    %v101 = vld [vmem:[%s3 + $0xe8] sm:$0xff]
    %v102 = vld [vmem:[%s3 + $0xf0] sm:$0xff]
    %v103 = vld [vmem:[%s3 + $0xf8] sm:$0xff]
    %v104 = vld [vmem:[%s3 + $0x100] sm:$0xff]
    %v105 = vld [vmem:[%s3 + $0x108] sm:$0xff]
    %v106 = vld [vmem:[%s3 + $0x110] sm:$0xff]
    %v107 = vld [vmem:[%s3 + $0x118] sm:$0xff]
    %v108 = vld [vmem:[%s3 + $0x120] sm:$0xff]
    %v109 = vld [vmem:[%s3 + $0x128] sm:$0xff]
    %v110 = vld [vmem:[%s3 + $0x130] sm:$0xff]
    %v111 = vld [vmem:[%s3 + $0x138] sm:$0xff]
    %v112 = vld [vmem:[%s3 + $0x140] sm:$0xff]
    %v113 = vld [vmem:[%s3 + $0x148] sm:$0xff]
    %v114 = vld [vmem:[%s3 + $0x150] sm:$0xff]
    %v115 = vld [vmem:[%s3 + $0x158] sm:$0xff]
    %v116 = vld [vmem:[%s3 + $0x160] sm:$0xff]
    %v117 = vld [vmem:[%s3 + $0x168] sm:$0xff]
    %v118 = vld [vmem:[%s3 + $0x170] sm:$0xff]
    %v119 = vld [vmem:[%s3 + $0x178] sm:$0xff]
    %v120 = vld [vmem:[%s3 + $0x180] sm:$0xff]
    %v121 = vld [vmem:[%s3 + $0x188] sm:$0xff]
    %v122 = vld [vmem:[%s3 + $0x190] sm:$0xff]
    %v123 = vld [vmem:[%s3 + $0x198] sm:$0xff]
    %v124 = vld [vmem:[%s3 + $0x1a0] sm:$0xff]
    %v125 = vld [vmem:[%s3 + $0x1a8] sm:$0xff]
    %v126 = vld [vmem:[%s3 + $0x1b0] sm:$0xff]
    %v127 = vld [vmem:[%s3 + $0x1b8] sm:$0xff]
    %v128 = vld [vmem:[%s3 + $0x1c0] sm:$0xff]
    %v129 = vld [vmem:[%s3 + $0x1c8] sm:$0xff]
    %v130 = vld [vmem:[%s3 + $0x1d0] sm:$0xff]
    %v131 = vld [vmem:[%s3 + $0x1d8] sm:$0xff]
    %v132 = vld [vmem:[%s3 + $0x1e0] sm:$0xff]
    %v133 = vld [vmem:[%s3 + $0x1e8] sm:$0xff]
    %v134 = vld [vmem:[%s3 + $0x1f0] sm:$0xff]
    %v135 = vld [vmem:[%s3 + $0x1f8] sm:$0xff]
    %v136 = vld [vmem:[%s4] sm:$0xf]
    %v138 = vperm.slane %v136, 0
    %v139 = vperm.slane %v136, 1
    %v140 = vperm.slane %v136, 2
    %v141 = vperm.slane %v136, 3
    %146 = vmatpush.msra.mxu0 %v132
    %147 = vmatpush.msra.mxu0 %v128
    %148 = vmatpush.msra.mxu0 %v124
    %149 = vmatpush.msra.mxu0 %v120
    %150 = vmatpush.msra.mxu0 %v116
    %151 = vmatpush.msra.mxu0 %v112
    %152 = vmatpush.msra.mxu0 %v108
    %153 = vmatpush.msra.mxu0 %v104
    %154 = vmatpush.msra.mxu0 %v100
    %155 = vmatpush.msra.mxu0 %v96
    %156 = vmatpush.msra.mxu0 %v92
    %157 = vmatpush.msra.mxu0 %v88
    %158 = vmatpush.msra.mxu0 %v84
    %159 = vmatpush.msra.mxu0 %v80
    %160 = vmatpush.msra.mxu0 %v76
    %161 = vmatpush.msra.mxu0 %v72
    %162 = vmatmul.f32.gmra.mxu0 %v71
    %v163 = vpop.f32.mrf.mxu0
    %v164 = vadd.f32 %v138, %v163
    %165 = vdwg.mxu0
    %166 = vmatpush.msra.mxu0 %v133
    %167 = vmatpush.msra.mxu0 %v129
    %168 = vmatpush.msra.mxu0 %v125
    %169 = vmatpush.msra.mxu0 %v121
    %170 = vmatpush.msra.mxu0 %v117
    %171 = vmatpush.msra.mxu0 %v113
    %172 = vmatpush.msra.mxu0 %v109
    %173 = vmatpush.msra.mxu0 %v105
    %174 = vmatpush.msra.mxu0 %v101
    %175 = vmatpush.msra.mxu0 %v97
    %176 = vmatpush.msra.mxu0 %v93
    %177 = vmatpush.msra.mxu0 %v89
    %178 = vmatpush.msra.mxu0 %v85
    %179 = vmatpush.msra.mxu0 %v81
    %180 = vmatpush.msra.mxu0 %v77
    %181 = vmatpush.msra.mxu0 %v73
    %182 = vmatmul.f32.gmra.mxu0 %v71
    %v183 = vpop.f32.mrf.mxu0
    %v184 = vadd.f32 %v139, %v183
    %185 = vdwg.mxu0
    %186 = vmatpush.msra.mxu0 %v134
    %187 = vmatpush.msra.mxu0 %v130
    %188 = vmatpush.msra.mxu0 %v126
    %189 = vmatpush.msra.mxu0 %v122
    %190 = vmatpush.msra.mxu0 %v118
    %191 = vmatpush.msra.mxu0 %v114
    %192 = vmatpush.msra.mxu0 %v110
    %193 = vmatpush.msra.mxu0 %v106
    %194 = vmatpush.msra.mxu0 %v102
    %195 = vmatpush.msra.mxu0 %v98
    %196 = vmatpush.msra.mxu0 %v94
    %197 = vmatpush.msra.mxu0 %v90
    %198 = vmatpush.msra.mxu0 %v86
    %199 = vmatpush.msra.mxu0 %v82
    %200 = vmatpush.msra.mxu0 %v78
    %201 = vmatpush.msra.mxu0 %v74
    %202 = vmatmul.f32.gmra.mxu0 %v71
    %v203 = vpop.f32.mrf.mxu0
    %v204 = vadd.f32 %v140, %v203
    %205 = vdwg.mxu0
    %206 = vmatpush.msra.mxu0 %v135
    %207 = vmatpush.msra.mxu0 %v131
    %208 = vmatpush.msra.mxu0 %v127
    %209 = vmatpush.msra.mxu0 %v123
    %210 = vmatpush.msra.mxu0 %v119
    %211 = vmatpush.msra.mxu0 %v115
    %212 = vmatpush.msra.mxu0 %v111
    %213 = vmatpush.msra.mxu0 %v107
    %214 = vmatpush.msra.mxu0 %v103
    %215 = vmatpush.msra.mxu0 %v99
    %216 = vmatpush.msra.mxu0 %v95
    %217 = vmatpush.msra.mxu0 %v91
    %218 = vmatpush.msra.mxu0 %v87
    %219 = vmatpush.msra.mxu0 %v83
    %220 = vmatpush.msra.mxu0 %v79
    %221 = vmatpush.msra.mxu0 %v75
    %222 = vmatmul.f32.gmra.mxu0 %v71
    %v223 = vpop.f32.mrf.mxu0
    %v224 = vadd.f32 %v141, %v223
    %225 = vdwg.mxu0
    %226 = vst [vmem:[#allocation2] sm:$0xff] %v164
    %227 = vst [vmem:[#allocation2 + $0x8] sm:$0xff] %v184
    %228 = vst [vmem:[#allocation2 + $0x10] sm:$0xff] %v204
    %229 = vst [vmem:[#allocation2 + $0x18] sm:$0xff] %v224
    %v230 = vmul.f32 %v164, %v164
    %v231 = vmul.f32 %v184, %v184
    %v232 = vmul.f32 %v204, %v204
    %v233 = vmul.f32 %v224, %v224
    %v234 = vadd.f32 %v230, %v231
    %v235 = vadd.f32 %v234, %v232
    %v236 = vadd.f32 %v235, %v233
    %237 = vadd.xlane.f32.xlu0 %v236
    %v238 = vpop.xlane.xlu0 %237
    %vm239 = vcmask 7168
    %240 = vst.msk [vmem:[#allocation3] sm:$0xff] %vm239, %v238
    %241 = vst [vmem:[#allocation4] sm:$0xff] inf
  $region33: #{_lambda_.1} parent=0 // pred_fallthru
    _
  %v242 = vld [vmem:[#allocation2] sm:$0xff]
  %v243 = vld [vmem:[#allocation2 + $0x8] sm:$0xff]
  %v244 = vld [vmem:[#allocation2 + $0x10] sm:$0xff]
  %v245 = vld [vmem:[#allocation2 + $0x18] sm:$0xff]
  %v246 = vld [vmem:[%s5] sm:$0xff]
  %v247 = vld [vmem:[%s5 + $0x8] sm:$0xff]
  %v248 = vld [vmem:[%s5 + $0x10] sm:$0xff]
  %v249 = vld [vmem:[%s5 + $0x18] sm:$0xff]
  %v250 = vld [vmem:[%s5 + $0x20] sm:$0xff]
  %v251 = vld [vmem:[%s5 + $0x28] sm:$0xff]
  %v252 = vld [vmem:[%s5 + $0x30] sm:$0xff]
  %v253 = vld [vmem:[%s5 + $0x38] sm:$0xff]
  %v254 = vld [vmem:[%s5 + $0x40] sm:$0xff]
  %v255 = vld [vmem:[%s5 + $0x48] sm:$0xff]
  %v256 = vld [vmem:[%s5 + $0x50] sm:$0xff]
  %v257 = vld [vmem:[%s5 + $0x58] sm:$0xff]
  %v258 = vld [vmem:[%s5 + $0x60] sm:$0xff]
  %v259 = vld [vmem:[%s5 + $0x68] sm:$0xff]
  %v260 = vld [vmem:[%s5 + $0x70] sm:$0xff]
  %v261 = vld [vmem:[%s5 + $0x78] sm:$0xff]
  %v262 = vld [vmem:[%s5 + $0x80] sm:$0xff]
  %v263 = vld [vmem:[%s5 + $0x88] sm:$0xff]
  %v264 = vld [vmem:[%s5 + $0x90] sm:$0xff]
  %v265 = vld [vmem:[%s5 + $0x98] sm:$0xff]
  %v266 = vld [vmem:[%s5 + $0xa0] sm:$0xff]
  %v267 = vld [vmem:[%s5 + $0xa8] sm:$0xff]
  %v268 = vld [vmem:[%s5 + $0xb0] sm:$0xff]
  %v269 = vld [vmem:[%s5 + $0xb8] sm:$0xff]
  %v270 = vld [vmem:[%s5 + $0xc0] sm:$0xff]
  %v271 = vld [vmem:[%s5 + $0xc8] sm:$0xff]
  %v272 = vld [vmem:[%s5 + $0xd0] sm:$0xff]
  %v273 = vld [vmem:[%s5 + $0xd8] sm:$0xff]
  %v274 = vld [vmem:[%s5 + $0xe0] sm:$0xff]
  %v275 = vld [vmem:[%s5 + $0xe8] sm:$0xff]
  %v276 = vld [vmem:[%s5 + $0xf0] sm:$0xff]
  %v277 = vld [vmem:[%s5 + $0xf8] sm:$0xff]
  %v278 = vld [vmem:[%s5 + $0x100] sm:$0xff]
  %v279 = vld [vmem:[%s5 + $0x108] sm:$0xff]
  %v280 = vld [vmem:[%s5 + $0x110] sm:$0xff]
  %v281 = vld [vmem:[%s5 + $0x118] sm:$0xff]
  %v282 = vld [vmem:[%s5 + $0x120] sm:$0xff]
  %v283 = vld [vmem:[%s5 + $0x128] sm:$0xff]
  %v284 = vld [vmem:[%s5 + $0x130] sm:$0xff]
  %v285 = vld [vmem:[%s5 + $0x138] sm:$0xff]
  %v286 = vld [vmem:[%s5 + $0x140] sm:$0xff]
  %v287 = vld [vmem:[%s5 + $0x148] sm:$0xff]
  %v288 = vld [vmem:[%s5 + $0x150] sm:$0xff]
  %v289 = vld [vmem:[%s5 + $0x158] sm:$0xff]
  %v290 = vld [vmem:[%s5 + $0x160] sm:$0xff]
  %v291 = vld [vmem:[%s5 + $0x168] sm:$0xff]
  %v292 = vld [vmem:[%s5 + $0x170] sm:$0xff]
  %v293 = vld [vmem:[%s5 + $0x178] sm:$0xff]
  %v294 = vld [vmem:[%s5 + $0x180] sm:$0xff]
  %v295 = vld [vmem:[%s5 + $0x188] sm:$0xff]
  %v296 = vld [vmem:[%s5 + $0x190] sm:$0xff]
  %v297 = vld [vmem:[%s5 + $0x198] sm:$0xff]
  %v298 = vld [vmem:[%s5 + $0x1a0] sm:$0xff]
  %v299 = vld [vmem:[%s5 + $0x1a8] sm:$0xff]
  %v300 = vld [vmem:[%s5 + $0x1b0] sm:$0xff]
  %v301 = vld [vmem:[%s5 + $0x1b8] sm:$0xff]
  %v302 = vld [vmem:[%s5 + $0x1c0] sm:$0xff]
  %v303 = vld [vmem:[%s5 + $0x1c8] sm:$0xff]
  %v304 = vld [vmem:[%s5 + $0x1d0] sm:$0xff]
  %v305 = vld [vmem:[%s5 + $0x1d8] sm:$0xff]
  %v306 = vld [vmem:[%s5 + $0x1e0] sm:$0xff]
  %v307 = vld [vmem:[%s5 + $0x1e8] sm:$0xff]
  %v308 = vld [vmem:[%s5 + $0x1f0] sm:$0xff]
  %v309 = vld [vmem:[%s5 + $0x1f8] sm:$0xff]
  %310 = vmatpush.xpose.msra.mxu0 %v306
  %311 = vmatpush.xpose.msra.mxu0 %v302
  %312 = vmatpush.xpose.msra.mxu0 %v298
  %313 = vmatpush.xpose.msra.mxu0 %v294
  %314 = vmatpush.xpose.msra.mxu0 %v290
  %315 = vmatpush.xpose.msra.mxu0 %v286
  %316 = vmatpush.xpose.msra.mxu0 %v282
  %317 = vmatpush.xpose.msra.mxu0 %v278
  %318 = vmatpush.xpose.msra.mxu0 %v274
  %319 = vmatpush.xpose.msra.mxu0 %v270
  %320 = vmatpush.xpose.msra.mxu0 %v266
  %321 = vmatpush.xpose.msra.mxu0 %v262
  %322 = vmatpush.xpose.msra.mxu0 %v258
  %323 = vmatpush.xpose.msra.mxu0 %v254
  %324 = vmatpush.xpose.msra.mxu0 %v250
  %325 = vmatpush.xpose.msra.mxu0 %v246
  %326 = vmatmul.f32.gmra.mxu0 %v242
  %v327 = vpop.f32.mrf.mxu0
  %v328 = vadd.f32 0.0, %v327
  %329 = vdwg.mxu0
  %330 = vmatpush.xpose.msra.mxu0 %v307
  %331 = vmatpush.xpose.msra.mxu0 %v303
  %332 = vmatpush.xpose.msra.mxu0 %v299
  %333 = vmatpush.xpose.msra.mxu0 %v295
  %334 = vmatpush.xpose.msra.mxu0 %v291
  %335 = vmatpush.xpose.msra.mxu0 %v287
  %336 = vmatpush.xpose.msra.mxu0 %v283
  %337 = vmatpush.xpose.msra.mxu0 %v279
  %338 = vmatpush.xpose.msra.mxu0 %v275
  %339 = vmatpush.xpose.msra.mxu0 %v271
  %340 = vmatpush.xpose.msra.mxu0 %v267
  %341 = vmatpush.xpose.msra.mxu0 %v263
  %342 = vmatpush.xpose.msra.mxu0 %v259
  %343 = vmatpush.xpose.msra.mxu0 %v255
  %344 = vmatpush.xpose.msra.mxu0 %v251
  %345 = vmatpush.xpose.msra.mxu0 %v247
  %346 = vmatmul.f32.gmra.mxu0 %v243
  %v347 = vpop.f32.mrf.mxu0
  %v348 = vadd.f32 %v328, %v347
  %349 = vdwg.mxu0
  %350 = vmatpush.xpose.msra.mxu0 %v308
  %351 = vmatpush.xpose.msra.mxu0 %v304
  %352 = vmatpush.xpose.msra.mxu0 %v300
  %353 = vmatpush.xpose.msra.mxu0 %v296
  %354 = vmatpush.xpose.msra.mxu0 %v292
  %355 = vmatpush.xpose.msra.mxu0 %v288
  %356 = vmatpush.xpose.msra.mxu0 %v284
  %357 = vmatpush.xpose.msra.mxu0 %v280
  %358 = vmatpush.xpose.msra.mxu0 %v276
  %359 = vmatpush.xpose.msra.mxu0 %v272
  %360 = vmatpush.xpose.msra.mxu0 %v268
  %361 = vmatpush.xpose.msra.mxu0 %v264
  %362 = vmatpush.xpose.msra.mxu0 %v260
  %363 = vmatpush.xpose.msra.mxu0 %v256
  %364 = vmatpush.xpose.msra.mxu0 %v252
  %365 = vmatpush.xpose.msra.mxu0 %v248
  %366 = vmatmul.f32.gmra.mxu0 %v244
  %v367 = vpop.f32.mrf.mxu0
  %v368 = vadd.f32 %v348, %v367
  %369 = vdwg.mxu0
  %370 = vmatpush.xpose.msra.mxu0 %v309
  %371 = vmatpush.xpose.msra.mxu0 %v305
  %372 = vmatpush.xpose.msra.mxu0 %v301
  %373 = vmatpush.xpose.msra.mxu0 %v297
  %374 = vmatpush.xpose.msra.mxu0 %v293
  %375 = vmatpush.xpose.msra.mxu0 %v289
  %376 = vmatpush.xpose.msra.mxu0 %v285
  %377 = vmatpush.xpose.msra.mxu0 %v281
  %378 = vmatpush.xpose.msra.mxu0 %v277
  %379 = vmatpush.xpose.msra.mxu0 %v273
  %380 = vmatpush.xpose.msra.mxu0 %v269
  %381 = vmatpush.xpose.msra.mxu0 %v265
  %382 = vmatpush.xpose.msra.mxu0 %v261
  %383 = vmatpush.xpose.msra.mxu0 %v257
  %384 = vmatpush.xpose.msra.mxu0 %v253
  %385 = vmatpush.xpose.msra.mxu0 %v249
  %386 = vmatmul.f32.gmra.mxu0 %v245
  %v387 = vpop.f32.mrf.mxu0
  %v388 = vadd.f32 %v368, %v387
  %389 = vdwg.mxu0
  %v390 = vld [vmem:[#allocation3] sm:$0xff]
  %v391 = vld [vmem:[%s6] sm:$0x1]
  %393 = vset.pattern.permute.xlu0 0
  %394 = vperm.xlu0 %393, %v390
  %v395 = vpop.permute.xlu0 %394
  %v398 = vperm.slane %v391, 0
  %v400 = vadd.f32 %v395, %v398
  %v401 = vmul.f32 %v388, 2.0
  %v402 = vsub.f32 %v400, %v401
  %v403 = vld [vmem:[#allocation4] sm:$0xff]
  %v404 = vlaneseq
  %v405 = vand.u32 %v404, 127
  %v406 = vadd.s32 %v405, 128
  %v407 = vmin.f32 %v402, %v403
  %408 = vmin.xlane.f32.xlu0 %v407
  %v409 = vpop.xlane.xlu0 %408
  %vm410 = vcmp.eq.f32.partialorder %v402, %v409
  %vm411 = vcmp.eq.f32.partialorder %v403, %v409
  %v412 = vsel %vm410, %v405, 256
  %v413 = vsel %vm411, %v406, 256
  %vm414 = vcmp.lt.s32.totalorder %v412, %v413
  %v415 = vsel %vm414, %v412, %v413
  %v416 = vand.u32 %v415, 65535
  %v417 = vshra.s32 %v415, 16
  %v418 = vcvt.s32.f32 %v416
  %v419 = vcvt.s32.f32 %v417
  %420 = vmin.xlane.f32.xlu0 %v419
  %v421 = vpop.xlane.xlu0 %420
  %vm422 = vcmp.eq.f32.partialorder %v419, %v421
  %v423 = vsel %vm422, %v418, inf
  %424 = vmin.xlane.f32.xlu0 %v423
  %v425 = vpop.xlane.xlu0 %424
  %v426 = vcvt.f32.s32 %v425
  %v427 = vcvt.f32.s32 %v421
  %v428 = vshll.u32 %v427, 16
  %v429 = vadd.s32 %v428, %v426
  %vm430 = vcmp.eq.s32.totalorder %v405, %v429
  %vm431 = vcmp.eq.s32.totalorder %v406, %v429
  %v432 = vsel %vm430, inf, %v402
  %v433 = vsel %vm431, inf, %v403
  %vm434 = vcmp.eq.s32.totalorder %v405, 0
  %v435 = vsel %vm434, %v409, inf
  %v436 = vmin.f32 %v432, %v433
  %437 = vmin.xlane.f32.xlu0 %v436
  %v438 = vpop.xlane.xlu0 %437
  %vm439 = vcmp.eq.f32.partialorder %v432, %v438
  %vm440 = vcmp.eq.f32.partialorder %v433, %v438
  %v441 = vsel %vm439, %v405, 256
  %v442 = vsel %vm440, %v406, 256
  %vm443 = vcmp.lt.s32.totalorder %v441, %v442
  %v444 = vsel %vm443, %v441, %v442
  %v445 = vand.u32 %v444, 65535
  %v446 = vshra.s32 %v444, 16
  %v447 = vcvt.s32.f32 %v445
  %v448 = vcvt.s32.f32 %v446
  %449 = vmin.xlane.f32.xlu0 %v448
  %v450 = vpop.xlane.xlu0 %449
  %vm451 = vcmp.eq.f32.partialorder %v448, %v450
  %v452 = vsel %vm451, %v447, inf
  %453 = vmin.xlane.f32.xlu0 %v452
  %v454 = vpop.xlane.xlu0 %453
  %v455 = vcvt.f32.s32 %v454
  %v456 = vcvt.f32.s32 %v450
  %v457 = vshll.u32 %v456, 16
  %v458 = vadd.s32 %v457, %v455
  %vm459 = vcmp.eq.s32.totalorder %v405, %v458
  %vm460 = vcmp.eq.s32.totalorder %v406, %v458
  %v461 = vsel %vm459, inf, %v432
  %v462 = vsel %vm460, inf, %v433
  %vm463 = vcmp.eq.s32.totalorder %v405, 1
  %v464 = vsel %vm463, %v438, %v435
  %v465 = vmin.f32 %v461, %v462
  %466 = vmin.xlane.f32.xlu0 %v465
  %v467 = vpop.xlane.xlu0 %466
  %vm468 = vcmp.eq.f32.partialorder %v461, %v467
  %vm469 = vcmp.eq.f32.partialorder %v462, %v467
  %v470 = vsel %vm468, %v405, 256
  %v471 = vsel %vm469, %v406, 256
  %vm472 = vcmp.lt.s32.totalorder %v470, %v471
  %v473 = vsel %vm472, %v470, %v471
  %v474 = vand.u32 %v473, 65535
  %v475 = vshra.s32 %v473, 16
  %v476 = vcvt.s32.f32 %v474
  %v477 = vcvt.s32.f32 %v475
  %478 = vmin.xlane.f32.xlu0 %v477
  %v479 = vpop.xlane.xlu0 %478
  %vm480 = vcmp.eq.f32.partialorder %v477, %v479
  %v481 = vsel %vm480, %v476, inf
  %482 = vmin.xlane.f32.xlu0 %v481
  %v483 = vpop.xlane.xlu0 %482
  %v484 = vcvt.f32.s32 %v483
  %v485 = vcvt.f32.s32 %v479
  %v486 = vshll.u32 %v485, 16
  %v487 = vadd.s32 %v486, %v484
  %vm488 = vcmp.eq.s32.totalorder %v405, %v487
  %vm489 = vcmp.eq.s32.totalorder %v406, %v487
  %v490 = vsel %vm488, inf, %v461
  %v491 = vsel %vm489, inf, %v462
  %vm492 = vcmp.eq.s32.totalorder %v405, 2
  %v493 = vsel %vm492, %v467, %v464
  %v494 = vmin.f32 %v490, %v491
  %495 = vmin.xlane.f32.xlu0 %v494
  %v496 = vpop.xlane.xlu0 %495
  %vm497 = vcmp.eq.f32.partialorder %v490, %v496
  %vm498 = vcmp.eq.f32.partialorder %v491, %v496
  %v499 = vsel %vm497, %v405, 256
  %v500 = vsel %vm498, %v406, 256
  %vm501 = vcmp.lt.s32.totalorder %v499, %v500
  %v502 = vsel %vm501, %v499, %v500
  %v503 = vand.u32 %v502, 65535
  %v504 = vshra.s32 %v502, 16
  %v505 = vcvt.s32.f32 %v503
  %v506 = vcvt.s32.f32 %v504
  %507 = vmin.xlane.f32.xlu0 %v506
  %v508 = vpop.xlane.xlu0 %507
  %vm509 = vcmp.eq.f32.partialorder %v506, %v508
  %v510 = vsel %vm509, %v505, inf
  %511 = vmin.xlane.f32.xlu0 %v510
  %v512 = vpop.xlane.xlu0 %511
  %v513 = vcvt.f32.s32 %v512
  %v514 = vcvt.f32.s32 %v508
  %v515 = vshll.u32 %v514, 16
  %v516 = vadd.s32 %v515, %v513
  %vm517 = vcmp.eq.s32.totalorder %v405, %v516
  %vm518 = vcmp.eq.s32.totalorder %v406, %v516
  %v519 = vsel %vm517, inf, %v490
  %v520 = vsel %vm518, inf, %v491
  %vm521 = vcmp.eq.s32.totalorder %v405, 3
  %v522 = vsel %vm521, %v496, %v493
  %v523 = vmin.f32 %v519, %v520
  %524 = vmin.xlane.f32.xlu0 %v523
  %v525 = vpop.xlane.xlu0 %524
  %vm526 = vcmp.eq.s32.totalorder %v405, 4
  %v527 = vsel %vm526, %v525, %v522
  %528 = vst [vmem:[#allocation4] sm:$0xff] %v527
  // Predicated region
  $region34: #{_lambda_.1} parent=0 // pred_check
    %p529 = pneg %p26
  $region35: #{_lambda_.1} parent=0 // pred_check_branch
    %531 = sbr.rel (%p529) target = $region37
  $region36: #{_lambda_.1} parent=0 // pred_region
    %vm532 = vcmp.lt.s32.totalorder %v405, 5
    %v533 = vmax.f32 %v527, 0.0
    %v534 = vrsqrt.pop %v533
    %v535 = vmul.f32 %v534, %v533
    %v536 = vmul.f32 %v535, %v534
    %v537 = vmul.f32 0.5, %v536
    %v538 = vsub.f32 1.5, %v537
    %v539 = vmul.f32 %v534, %v538
    %v540 = vmul.f32 %v533, %v539
    %vm541 = vcmp.eq.f32.partialorder %v533, inf
    %v542 = vsel %vm541, %v533, %v540
    %vm543 = vcmp.eq.f32.partialorder %v533, 0.0
    %v544 = vand.u32 %v533, 2147483648
    %v545 = vsel %vm543, %v544, %v542
    %v546 = vsel %vm532, %v545, 0.0
    %547 = vadd.xlane.f32.xlu0 %v546
    %v548 = vpop.xlane.xlu0 %547
    %vm549 = vcmask 7168
    %550 = vst.msk [vmem:[%s7] sm:$0xff] %vm549, %v548
  $region37: #{_lambda_.1} parent=0 // pred_fallthru
    _
  // Predicated region
  $region38: #{_lambda_.1} parent=0 // pred_check
    _
  $region39: #{_lambda_.1} parent=0 // pred_check_branch
    %552 = sbr.rel (0) target = $region41
  $region40: #{_lambda_.1} parent=0 // pred_region
    _
  $region41: #{_lambda_.1} parent=0 // pred_fallthru
    _
  // Predicated region
  $region42: #{_lambda_.1} parent=0 // pred_check
    _
  $region43: #{_lambda_.1} parent=0 // pred_check_branch
    %554 = sbr.rel (0) target = $region45
  $region44: #{_lambda_.1} parent=0 // pred_region
    _
  $region45: #{_lambda_.1} parent=0 // pred_fallthru
    _

</llo_original>
